<compile_context>
chip_gen: v7x
topology: tpu7x:2x2x1
jax: 0.10.0
libtpu: 0.0.40
codegen_flags: <defaults>
</compile_context>

<pallas_src>
import functools

import jax
import jax.numpy as jnp
from jax.experimental import pallas as pl
from jax.experimental.pallas import tpu as pltpu

_BN_EPS = 1e-5          # nn.BatchNorm1d default
_DROPOUT_P = 0.5        # nn.Dropout default
_LEAKY_SLOPE = 0.2      # nn.LeakyReLU(0.2) as in _activations


def _dense_kernel(seed_ref, x_ref, w_ref, p_ref, o_ref,
                  *, activation, batch_norm, dropout):
    """Fused Linear + BatchNorm1d(training stats) + Dropout + activation."""
    x = x_ref[...].astype(jnp.float32)                       # (B, Fin)
    w = w_ref[...].astype(jnp.float32)                       # (Fin, N)

    # Linear (MXU). Bias is omitted here when batch_norm=True: BN's mean
    # subtraction cancels any per-feature bias, so it never needs to be added.
    y = jnp.dot(x, w, preferred_element_type=jnp.float32)    # (B, N)

    inv_keep = (1.0 / (1.0 - _DROPOUT_P)) if dropout else 1.0

    if batch_norm:
        gamma = p_ref[0:1, :].astype(jnp.float32)             # (1, N)
        beta = p_ref[1:2, :].astype(jnp.float32)              # (1, N)
        # One-pass training-mode BatchNorm1d stats: biased batch variance.
        mean = jnp.mean(y, axis=0, keepdims=True)              # (1, N)
        mean_sq = jnp.mean(y * y, axis=0, keepdims=True)       # (1, N)
        var = mean_sq - mean * mean
        inv_std = jax.lax.rsqrt(var + _BN_EPS)
        # Fold BN affine and the dropout survivor scale into one scale/shift.
        g = gamma * inv_std                                    # (1, N)
        scale = inv_keep * g
        shift = inv_keep * (beta - mean * g)
        y = y * scale + shift
    else:
        b = p_ref[0:1, :].astype(jnp.float32)                  # (1, N)
        y = (y + b) * inv_keep if dropout else y + b

    if dropout:
        # Training-mode Dropout(p=0.5): zero half the elements; survivors were
        # already scaled by 1/(1-p) above. Deterministic counter-based hash
        # (murmur3 finalizer) so it lowers on TPU and in interpret mode alike.
        seed_u = seed_ref[0].astype(jnp.uint32)
        B, N = y.shape
        row = jax.lax.broadcasted_iota(jnp.int32, (B, N), 0)
        col = jax.lax.broadcasted_iota(jnp.int32, (B, N), 1)
        r = (row * N + col).astype(jnp.uint32)
        r = r + (seed_u + jnp.uint32(1)) * jnp.uint32(0x9E3779B9)
        r = r ^ (r >> 16)
        r = r * jnp.uint32(0x7FEB352D)
        r = r ^ (r >> 15)
        r = r * jnp.uint32(0x846CA68B)
        r = r ^ (r >> 16)
        keep = (r & jnp.uint32(1)) == jnp.uint32(0)            # p_keep = 0.5
        y = jnp.where(keep, y, 0.0)

    if activation == "relu":
        y = jnp.maximum(y, 0.0)
    elif activation == "leaky_relu":
        y = jnp.where(y > 0, y, _LEAKY_SLOPE * y)
    elif activation == "tanh":
        y = jnp.tanh(y)
    else:
        raise ValueError(f"unknown activation {activation!r}")

    o_ref[...] = y.astype(o_ref.dtype)


def dense_module_forward(x, w, b, gamma, beta, seed,
                         *, activation="leaky_relu", batch_norm=True, dropout=True):
    """Pallas wrapper for DenseModule.forward (training-mode BN / dropout).

    x:      (B, Fin)   float32
    w:      (Fin, N)   float32   (transposed PyTorch nn.Linear layout)
    b:      (N,)       float32   (only used when batch_norm=False; BN cancels it)
    gamma:  (N,)       float32   (BatchNorm weight)
    beta:   (N,)       float32   (BatchNorm bias)
    seed:   int seed for the dropout mask
    """
    B, Fin = x.shape
    N = w.shape[1]

    # Collapse the per-feature params into a single (k, N) VMEM input.
    if batch_norm:
        params = jnp.stack(
            [gamma.astype(jnp.float32), beta.astype(jnp.float32)], axis=0)   # (2, N)
    else:
        params = b.reshape(1, N).astype(jnp.float32)                         # (1, N)

    seed_arr = jnp.asarray([seed], dtype=jnp.int32)

    kernel = functools.partial(
        _dense_kernel,
        activation=activation, batch_norm=batch_norm, dropout=dropout)

    # Small problem: one grid point, whole arrays live in VMEM, seed in SMEM.
    # TODO(synk): for large N, add a "parallel" grid over the feature axis only
    # (never the batch axis, which would corrupt the BN statistics).
    return pl.pallas_call(
        kernel,
        out_shape=jax.ShapeDtypeStruct((B, N), jnp.float32),
        in_specs=[
            pl.BlockSpec(memory_space=pltpu.MemorySpace.SMEM),   # seed
            pl.BlockSpec(memory_space=pltpu.MemorySpace.VMEM),   # x
            pl.BlockSpec(memory_space=pltpu.MemorySpace.VMEM),   # w
            pl.BlockSpec(memory_space=pltpu.MemorySpace.VMEM),   # params
        ],
        out_specs=pl.BlockSpec(memory_space=pltpu.MemorySpace.VMEM),
    )(seed_arr, x, w, params)


def _reference_no_dropout(x, w, b, gamma, beta, *, activation, batch_norm):
    """Pure-JAX reference (PyTorch forward semantics, dropout disabled)."""
    y = x @ w + b
    if batch_norm:
        mean = jnp.mean(y, axis=0, keepdims=True)
        var = jnp.mean((y - mean) ** 2, axis=0, keepdims=True)   # biased, train mode
        y = gamma * (y - mean) * jax.lax.rsqrt(var + _BN_EPS) + beta
    if activation == "relu":
        return jnp.maximum(y, 0.0)
    if activation == "leaky_relu":
        return jnp.where(y > 0, y, _LEAKY_SLOPE * y)
    return jnp.tanh(y)


if __name__ == "__main__":
    # Small shapes consistent with the module: batch=8, in_features=32, n_neurons=128.
    B, FIN, N = 8, 32, 128

    key = jax.random.PRNGKey(0)
    kx, kw, kb = jax.random.split(key, 3)

    x = jax.random.normal(kx, (B, FIN), dtype=jnp.float32)

    # Deterministic parameter init (shapes from nn.LazyLinear(n_neurons) + LazyBatchNorm1d).
    bound = 1.0 / (FIN ** 0.5)
    w = jax.random.uniform(kw, (FIN, N), minval=-bound, maxval=bound, dtype=jnp.float32)
    b = jax.random.uniform(kb, (N,), minval=-bound, maxval=bound, dtype=jnp.float32)
    gamma = jnp.ones((N,), dtype=jnp.float32)    # BatchNorm1d weight init
    beta = jnp.zeros((N,), dtype=jnp.float32)    # BatchNorm1d bias init

    # Correctness self-check against a pure-JAX reference (dropout disabled so it
    # is deterministic); also validates the "bias cancels under BN" optimization.
    out_nd = dense_module_forward(
        x, w, b, gamma, beta, seed=0,
        activation="leaky_relu", batch_norm=True, dropout=False)
    ref = _reference_no_dropout(
        x, w, b, gamma, beta, activation="leaky_relu", batch_norm=True)
    jax.block_until_ready(out_nd)
    assert jnp.allclose(out_nd, ref, atol=1e-2, rtol=1e-2), "mismatch vs reference"

    # Full training-mode forward: Linear -> BN -> Dropout(0.5) -> LeakyReLU(0.2).
    out = dense_module_forward(
        x, w, b, gamma, beta, seed=1234,
        activation="leaky_relu", batch_norm=True, dropout=True)
    jax.block_until_ready(out)

    assert out.shape == (B, N) and out.dtype == jnp.float32
    print("KERNEL_OK")
</pallas_src>

<mosaic_0001>
module attributes {stable_mosaic.version = 11 : i64} {
  func.func @_dense_kernel(%arg0: memref<1xi32, #tpu.memory_space<smem>>, %arg1: memref<8x32xf32, #tpu.memory_space<vmem>>, %arg2: memref<32x128xf32, #tpu.memory_space<vmem>>, %arg3: memref<2x128xf32, #tpu.memory_space<vmem>>, %arg4: memref<8x128xf32, #tpu.memory_space<vmem>>) attributes {dimension_semantics = [], scalar_prefetch = 0 : i64, scratch_operands = 0 : i64, tpu.core_type = #tpu.core_type<tc>} {
    %c0 = arith.constant 0 : index
    %c0_0 = arith.constant 0 : index
    %0 = vector.load %arg1[%c0, %c0_0] : memref<8x32xf32, #tpu.memory_space<vmem>>, vector<8x32xf32>
    %c0_1 = arith.constant 0 : index
    %c0_2 = arith.constant 0 : index
    %1 = vector.load %arg2[%c0_1, %c0_2] : memref<32x128xf32, #tpu.memory_space<vmem>>, vector<32x128xf32>
    %cst = arith.constant dense<0.000000e+00> : vector<8x128xf32>
    %2 = tpu.matmul %0, %1, %cst {dimension_numbers = #tpu.dot_dimension_numbers<[1], [0], [0], [1], [0, 0, 1, 1], [], []>} : vector<8x32xf32>, vector<32x128xf32>, vector<8x128xf32> -> vector<8x128xf32>
    %c0_3 = arith.constant 0 : index
    %c0_4 = arith.constant 0 : index
    %3 = vector.load %arg3[%c0_3, %c0_4] : memref<2x128xf32, #tpu.memory_space<vmem>>, vector<1x128xf32>
    %c1 = arith.constant 1 : index
    %c0_5 = arith.constant 0 : index
    %4 = vector.load %arg3[%c1, %c0_5] : memref<2x128xf32, #tpu.memory_space<vmem>>, vector<1x128xf32>
    %cst_6 = arith.constant dense<0.000000e+00> : vector<128xf32>
    %5 = vector.multi_reduction <add>, %2, %cst_6 [0] : vector<8x128xf32> to vector<128xf32>
    %6 = vector.shape_cast %5 : vector<128xf32> to vector<1x128xf32>
    %cst_7 = arith.constant 8.000000e+00 : f32
    %7 = vector.broadcast %cst_7 : f32 to vector<1x128xf32>
    %8 = arith.divf %6, %7 : vector<1x128xf32>
    %9 = arith.mulf %2, %2 : vector<8x128xf32>
    %cst_8 = arith.constant dense<0.000000e+00> : vector<128xf32>
    %10 = vector.multi_reduction <add>, %9, %cst_8 [0] : vector<8x128xf32> to vector<128xf32>
    %11 = vector.shape_cast %10 : vector<128xf32> to vector<1x128xf32>
    %cst_9 = arith.constant 8.000000e+00 : f32
    %12 = vector.broadcast %cst_9 : f32 to vector<1x128xf32>
    %13 = arith.divf %11, %12 : vector<1x128xf32>
    %14 = arith.mulf %8, %8 : vector<1x128xf32>
    %15 = arith.subf %13, %14 : vector<1x128xf32>
    %cst_10 = arith.constant 9.99999974E-6 : f32
    %16 = vector.broadcast %cst_10 : f32 to vector<1x128xf32>
    %17 = arith.addf %15, %16 : vector<1x128xf32>
    %18 = math.rsqrt %17 : vector<1x128xf32>
    %19 = arith.mulf %3, %18 : vector<1x128xf32>
    %cst_11 = arith.constant 1.000000e+00 : f32
    %20 = vector.broadcast %cst_11 : f32 to vector<1x128xf32>
    %21 = arith.mulf %20, %19 : vector<1x128xf32>
    %22 = arith.mulf %8, %19 : vector<1x128xf32>
    %23 = arith.subf %4, %22 : vector<1x128xf32>
    %cst_12 = arith.constant 1.000000e+00 : f32
    %24 = vector.broadcast %cst_12 : f32 to vector<1x128xf32>
    %25 = arith.mulf %24, %23 : vector<1x128xf32>
    %26 = vector.broadcast %21 : vector<1x128xf32> to vector<8x128xf32>
    %27 = arith.mulf %2, %26 : vector<8x128xf32>
    %28 = vector.broadcast %25 : vector<1x128xf32> to vector<8x128xf32>
    %29 = arith.addf %27, %28 : vector<8x128xf32>
    %cst_13 = arith.constant 0.000000e+00 : f32
    %30 = vector.broadcast %cst_13 : f32 to vector<8x128xf32>
    %31 = arith.cmpf ogt, %29, %30 : vector<8x128xf32>
    %cst_14 = arith.constant 2.000000e-01 : f32
    %32 = vector.broadcast %cst_14 : f32 to vector<8x128xf32>
    %33 = arith.mulf %32, %29 : vector<8x128xf32>
    %34 = arith.select %31, %29, %33 : vector<8x128xi1>, vector<8x128xf32>
    %c0_15 = arith.constant 0 : index
    %c0_16 = arith.constant 0 : index
    %35 = vector.load %arg4[%c0_15, %c0_16] : memref<8x128xf32, #tpu.memory_space<vmem>>, vector<8x128xf32>
    tpu.vector_store %arg4[%c0_15, %c0_16], %34 {strides = array<i32>} : memref<8x128xf32, #tpu.memory_space<vmem>>, vector<8x128xf32>,
    return
  }
}

</mosaic_0001>

<llo_original>
// kernel: tpu_custom_call.1
$region0: #{tpu_custom_call.1}
  #allocation0 [shape = 'u32[]', space=smem, size = 0x4, offset = 0x4, fixed_abs, tag = 'smem constant byte address 0x4 - core index']
  #allocation1 [shape = 'u32[144,128]{1,0:T(1,128)}', space=vmem, size = 0x12000, scoped, tag = 'internal scratch']
  #allocation2 [shape = 's32[1]{0:T(128)S(6)}', space=smem, size = 0x200, scoped, tag = 'scoped memory for tpu_custom_call.1']
  %s0 = inlined_call_operand.<no memory space> [shape: s32[1], index: 0, kind: input, shape index: {}]
  %s1 = inlined_call_operand.hbm [shape: f32[8,32], index: 1, kind: input, shape index: {}]
  %s2 = inlined_call_operand.hbm [shape: f32[32,128], index: 2, kind: input, shape index: {}]
  %s3 = inlined_call_operand.vmem [shape: f32[2,128], index: 3, kind: input, shape index: {}]
  %s4 = inlined_call_operand.hbm [shape: f32[8,128], index: 4, kind: output, shape index: {}]
  %s5 = sld [smem:[#allocation0]]
  $region34: #{tpu_custom_call.1} parent=0
    _
  %s7 = ssub.s32 1, %s5
  %s8 = scalar_select 0, %s7, %s5
  %9 = sst [smem:[#allocation2]] %s0
  $region1: #{tpu_custom_call.1} parent=0
    #allocation3 [shape = 'u8[4096]{0}', space=vmem, size = 0x1000, scoped, tag = 'input window, operand 1, single buffered']
    #allocation4 [shape = 's32[1]{0}', space=sflag, size = 0x4, scoped, tag = 'scoped memory for tpu_custom_call.1']
    #allocation5 [shape = 's32[1]{0}', space=sflag, size = 0x4, scoped, tag = 'scoped memory for tpu_custom_call.1']
    #allocation6 [shape = 'u8[16384]{0}', space=vmem, size = 0x4000, scoped, tag = 'input window, operand 2, single buffered']
    #allocation7 [shape = 's32[1]{0}', space=sflag, size = 0x4, scoped, tag = 'scoped memory for tpu_custom_call.1']
    #allocation8 [shape = 'u8[4096]{0}', space=vmem, size = 0x1000, scoped, tag = 'output window, operand 0, single buffered']
    %10 = vsyncpa [#allocation4], 0
    %11 = vsyncpa [#allocation7], 0
    %12 = vsyncpa [#allocation5], 0
    // Predicated region
    $region2: #{tpu_custom_call.1} parent=1 // pred_check
      _
    $region3: #{tpu_custom_call.1} parent=1 // pred_check_branch
      %14 = sbr.rel (0) target = $region5
    $region4: #{tpu_custom_call.1} parent=1 // pred_region
      _
    $region5: #{tpu_custom_call.1} parent=1 // pred_fallthru
      _
    // Predicated region
    $region6: #{tpu_custom_call.1} parent=1 // pred_check
      _
    $region7: #{tpu_custom_call.1} parent=1 // pred_check_branch
      %16 = sbr.rel (0) target = $region9
    $region8: #{tpu_custom_call.1} parent=1 // pred_region
      %s18 = ssub.s32 128, 128
      %19 = vsyncadd [#allocation4], %s18
      %s21 = sshll.u32 [#allocation3], 4
      %s22 = int_to_ptr.vmem [resolvable:$true] %s21
      %24 = dma.hbm_to_vmem [thread:$0]  %s1, 128, %s22, [#allocation4]
    $region9: #{tpu_custom_call.1} parent=1 // pred_fallthru
      _
    // Predicated region
    $region10: #{tpu_custom_call.1} parent=1 // pred_check
      _
    $region11: #{tpu_custom_call.1} parent=1 // pred_check_branch
      %26 = sbr.rel (0) target = $region13
    $region12: #{tpu_custom_call.1} parent=1 // pred_region
      %s28 = ssub.s32 512, 512
      %29 = vsyncadd [#allocation7], %s28
      %s30 = sshll.u32 [#allocation6], 4
      %s31 = int_to_ptr.vmem [resolvable:$true] %s30
      %36 = dma.hbm_to_vmem [thread:$0]  %s2, 512, %s31, [#allocation7], 128, 128, 8
    $region13: #{tpu_custom_call.1} parent=1 // pred_fallthru
      _
    // Predicated region
    $region14: #{tpu_custom_call.1} parent=1 // pred_check
      _
    $region15: #{tpu_custom_call.1} parent=1 // pred_check_branch
      %38 = sbr.rel (0) target = $region17
    $region16: #{tpu_custom_call.1} parent=1 // pred_region
      _
    $region17: #{tpu_custom_call.1} parent=1 // pred_fallthru
      _
    // Predicated region
    $region18: #{tpu_custom_call.1} parent=1 // pred_check
      _
    $region19: #{tpu_custom_call.1} parent=1 // pred_check_branch
      %40 = sbr.rel (0) target = $region21
    $region20: #{tpu_custom_call.1} parent=1 // pred_region
      %41 = dma.done [#allocation4], 128
    $region21: #{tpu_custom_call.1} parent=1 // pred_fallthru
      _
    // Predicated region
    $region22: #{tpu_custom_call.1} parent=1 // pred_check
      _
    $region23: #{tpu_custom_call.1} parent=1 // pred_check_branch
      %43 = sbr.rel (0) target = $region25
    $region24: #{tpu_custom_call.1} parent=1 // pred_region
      %44 = dma.done [#allocation7], 512
    $region25: #{tpu_custom_call.1} parent=1 // pred_fallthru
      _
    %v45 = vld [vmem:[#allocation3] sm:$0xff]
    %v46 = vld [vmem:[#allocation6] sm:$0xff]
    %v47 = vld [vmem:[#allocation6 + $0x8] sm:$0xff]
    %v48 = vld [vmem:[#allocation6 + $0x10] sm:$0xff]
    %v49 = vld [vmem:[#allocation6 + $0x18] sm:$0xff]
    %vm50 = vcmask 261120
    %v52 = vsel %vm50, %v45, 0
    %54 = vmatprep.subr.mxu0 0.0
    %55 = vmatpush1.msra.mxu0 %v46
    %56 = vmatprep.subr.mxu0 0.0
    %57 = vmatpush1.msra.mxu0 %v47
    %58 = vmatprep.subr.mxu0 0.0
    %59 = vmatpush1.msra.mxu0 %v48
    %60 = vmatprep.subr.mxu0 0.0
    %61 = vmatpush1.msra.mxu0 %v49
    %62 = vmatprep.subr.mxu0 0.0
    %63 = vmatpush1.msra.mxu0 0.0
    %64 = vmatprep.subr.mxu0 0.0
    %65 = vmatpush1.msra.mxu0 0.0
    %66 = vmatprep.subr.mxu0 0.0
    %67 = vmatpush1.msra.mxu0 0.0
    %68 = vmatprep.subr.mxu0 0.0
    %69 = vmatpush1.msra.mxu0 0.0
    %70 = vmatprep.subr.mxu0 0.0
    %71 = vmatpush1.msra.mxu0 0.0
    %72 = vmatprep.subr.mxu0 0.0
    %73 = vmatpush1.msra.mxu0 0.0
    %74 = vmatprep.subr.mxu0 0.0
    %75 = vmatpush1.msra.mxu0 0.0
    %76 = vmatprep.subr.mxu0 0.0
    %77 = vmatpush1.msra.mxu0 0.0
    %78 = vmatprep.subr.mxu0 0.0
    %79 = vmatpush1.msra.mxu0 0.0
    %80 = vmatprep.subr.mxu0 0.0
    %81 = vmatpush1.msra.mxu0 0.0
    %82 = vmatprep.subr.mxu0 0.0
    %83 = vmatpush1.msra.mxu0 0.0
    %84 = vmatprep.subr.mxu0 0.0
    %85 = vmatpush1.msra.mxu0 0.0
    %86 = vmatprep.subr.mxu0 0.0
    %87 = vmatpush1.msra.mxu0 0.0
    %88 = vmatprep.subr.mxu0 0.0
    %89 = vmatpush1.msra.mxu0 0.0
    %90 = vmatprep.subr.mxu0 0.0
    %91 = vmatpush1.msra.mxu0 0.0
    %92 = vmatprep.subr.mxu0 0.0
    %93 = vmatpush1.msra.mxu0 0.0
    %94 = vmatprep.subr.mxu0 0.0
    %95 = vmatpush1.msra.mxu0 0.0
    %96 = vmatprep.subr.mxu0 0.0
    %97 = vmatpush1.msra.mxu0 0.0
    %98 = vmatprep.subr.mxu0 0.0
    %99 = vmatpush1.msra.mxu0 0.0
    %100 = vmatprep.subr.mxu0 0.0
    %101 = vmatpush1.msra.mxu0 0.0
    %102 = vmatprep.subr.mxu0 0.0
    %103 = vmatpush1.msra.mxu0 0.0
    %104 = vmatprep.subr.mxu0 0.0
    %105 = vmatpush1.msra.mxu0 0.0
    %106 = vmatprep.subr.mxu0 0.0
    %107 = vmatpush1.msra.mxu0 0.0
    %108 = vmatprep.subr.mxu0 0.0
    %109 = vmatpush1.msra.mxu0 0.0
    %110 = vmatprep.subr.mxu0 0.0
    %111 = vmatpush1.msra.mxu0 0.0
    %112 = vmatprep.subr.mxu0 0.0
    %113 = vmatpush1.msra.mxu0 0.0
    %114 = vmatprep.subr.mxu0 0.0
    %115 = vmatpush1.msra.mxu0 0.0
    %116 = vmatprep.subr.mxu0 0.0
    %117 = vmatpush1.msra.mxu0 0.0
    %118 = vmatprep.mubr.f32.mxu0 0.0
    %119 = vmatmul.mubr.f32.gmra.mrb[0].mxu0 %v52
    %v120 = vpop.f32.mrb[0].mxu0
    %v121 = vadd.f32 0.0, %v120
    %v122 = vpop.f32.mrb[0].mxu0
    %123 = vdwg.mxu0
    %v124 = vld [vmem:[%s3] sm:$0x1]
    %v125 = vld [vmem:[%s3 + $0x1] sm:$0x1]
    %v126 = vrot.slane %v121, 4
    %v127 = vadd.f32 %v121, %v126
    %v128 = vrot.slane %v127, 2
    %v129 = vadd.f32 %v127, %v128
    %v130 = vrot.slane %v129, 1
    %v131 = vadd.f32 %v129, %v130
    %v132 = vrcp.pop 8.0
    %v133 = vmul.f32 %v131, %v132
    %v134 = vmul.f32 %v121, %v121
    %v135 = vrot.slane %v134, 4
    %v136 = vadd.f32 %v134, %v135
    %v137 = vrot.slane %v136, 2
    %v138 = vadd.f32 %v136, %v137
    %v139 = vrot.slane %v138, 1
    %v140 = vadd.f32 %v138, %v139
    %v141 = vmul.f32 %v140, %v132
    %v142 = vmul.f32 %v133, %v133
    %v143 = vsub.f32 %v141, %v142
    %v144 = vadd.f32 %v143, 1e-05
    %v145 = vrsqrt.pop %v144
    %v146 = vmul.f32 %v124, %v145
    %v147 = vmul.f32 %v133, %v146
    %v148 = vsub.f32 %v125, %v147
    %v149 = vlaneseq
    %v150 = vshrl.u32 %v149, 7
    %v151 = vsub.s32 0, %v150
    %v152 = vrot.slane %v146, %v151
    %v153 = vmul.f32 %v121, %v152
    %v154 = vlaneseq
    %v155 = vshrl.u32 %v154, 7
    %v156 = vsub.s32 0, %v155
    %v157 = vrot.slane %v148, %v156
    %v158 = vadd.f32 %v153, %v157
    %vm159 = vcmp.gt.f32.partialorder %v158, 0.0
    %v160 = vmul.f32 %v158, 0.2
    %v161 = vsel %vm159, %v158, %v160
    %162 = vst [vmem:[#allocation8] sm:$0xff] %v161
    // Predicated region
    $region26: #{tpu_custom_call.1} parent=1 // pred_check
      _
    $region27: #{tpu_custom_call.1} parent=1 // pred_check_branch
      %164 = sbr.rel (0) target = $region29
    $region28: #{tpu_custom_call.1} parent=1 // pred_region
      %s166 = ssub.s32 128, 128
      %167 = vsyncadd [#allocation5], %s166
      %s169 = sshll.u32 [#allocation8], 4
      %s170 = int_to_ptr.vmem [resolvable:$true] %s169
      %172 = dma.vmem_to_hbm [thread:$0]  %s170, 128, %s4, [#allocation5]
    $region29: #{tpu_custom_call.1} parent=1 // pred_fallthru
      _
    // Predicated region
    $region30: #{tpu_custom_call.1} parent=1 // pred_check
      _
    $region31: #{tpu_custom_call.1} parent=1 // pred_check_branch
      %174 = sbr.rel (0) target = $region33
    $region32: #{tpu_custom_call.1} parent=1 // pred_region
      %175 = dma.done [#allocation5], 128
    $region33: #{tpu_custom_call.1} parent=1 // pred_fallthru
      _
    %176 = vsyncpa [#allocation4], 1
    %177 = vsyncpa [#allocation7], 1
    %178 = vsyncpa [#allocation5], 1

</llo_original>
